<compile_context>
chip_gen: v7x
topology: tpu7x:2x2x1
jax: 0.10.0
libtpu: 0.0.40
codegen_flags: <defaults>
</compile_context>

<pallas_src>
import jax
import jax.numpy as jnp
from jax.experimental import pallas as pl
from jax.experimental.pallas import tpu as pltpu

_MIB = 1024 * 1024


def _round_up(x, m):
    return (x + m - 1) // m * m


def _cdiv(a, b):
    return (a + b - 1) // b


def _tpu_vmem_bytes():
    """Per-core VMEM capacity; conservative (v7x, 64 MiB) if undetectable."""
    try:
        info = pltpu.get_tpu_info()
        for attr in ("vmem_capacity_bytes", "vmem_size_bytes", "vmem_bytes"):
            v = getattr(info, attr, None)
            if v:
                return int(v)
    except Exception:
        pass
    return 64 * _MIB


def _tpu_num_tensorcores():
    """Number of TensorCores behind one device (2 on v7x); 1 if undetectable."""
    try:
        info = pltpu.get_tpu_info()
        for attr in ("num_cores", "core_count", "num_tensorcores"):
            v = getattr(info, attr, None)
            if v:
                return int(v)
    except Exception:
        pass
    try:
        return int(getattr(jax.devices()[0], "num_cores", 1) or 1)
    except Exception:
        return 1


# ---------------------------------------------------------------------------
# Kernels
# ---------------------------------------------------------------------------


def _linear_kernel_single(x_ref, w_ref, b_ref, o_ref):
    # Single K tile: no accumulator scratch, no init/finalize branches.
    x = x_ref[...]
    w = w_ref[...]
    if x.dtype != w.dtype:          # only when weight is stored narrower (bf16)
        x = x.astype(w.dtype)
    acc = jnp.dot(x, w, preferred_element_type=jnp.float32)
    o_ref[...] = (acc + b_ref[...]).astype(o_ref.dtype)


def _linear_kernel_ktiled(x_ref, w_ref, b_ref, o_ref, acc_ref):
    # x_ref: (tb, tk), w_ref: (tk, T), b_ref: (1, T), o_ref: (tb, T)
    k = pl.program_id(1)

    @pl.when(k == 0)
    def _init():
        acc_ref[...] = jnp.zeros_like(acc_ref)

    x = x_ref[...]
    w = w_ref[...]
    if x.dtype != w.dtype:
        x = x.astype(w.dtype)
    acc_ref[...] += jnp.dot(x, w, preferred_element_type=jnp.float32)

    @pl.when(k == pl.num_programs(1) - 1)
    def _fin():
        o_ref[...] = (acc_ref[...] + b_ref[...]).astype(o_ref.dtype)


# ---------------------------------------------------------------------------
# Parameter prep (one-time) + forward (per-call)
# ---------------------------------------------------------------------------


def prepare_classifier_head(
    weight,
    bias,
    *,
    features_dtype=jnp.float32,
    block_b=256,
    block_k=None,
    weight_dtype=None,
    input_vmem_budget_bytes=None,
):
    """One-time prep: transpose + F-pad the weight, plan the tiling. Cache the result."""
    T, F = weight.shape
    assert bias.shape == (T,)
    w_dtype = weight.dtype if weight_dtype is None else weight_dtype

    x_bytes = jnp.dtype(features_dtype).itemsize
    w_bytes = jnp.dtype(w_dtype).itemsize

    sub = max(8, 32 // max(1, x_bytes))      # dtype-aware sublane multiple (8/16/32)
    tb_max = _round_up(block_b, sub)         # budget against the largest batch tile
    T_vmem = _round_up(T, 128)               # lane-padded VMEM footprint of weight/out tiles

    vmem_cap = _tpu_vmem_bytes()
    if input_vmem_budget_bytes is None:
        # Double-buffered (x, w) tiles; leave ~20 MiB for out/acc/bias/compiler scratch.
        input_vmem_budget_bytes = min(44 * _MIB, max(24 * _MIB, vmem_cap - 20 * _MIB))

    per_k_elem_bytes = 2 * (tb_max * x_bytes + T_vmem * w_bytes)  # both double-buffered
    max_tk = max(128, (input_vmem_budget_bytes // per_k_elem_bytes) // 128 * 128)
    if block_k is not None:
        max_tk = max(128, min(max_tk, (block_k // 128) * 128))

    # Pad F to 128 first, then pick tk as an (almost-)divisor of F_pad so padding
    # never exceeds (num_k - 1) * 128 columns.
    f_units = _cdiv(F, 128)
    if f_units * 128 <= max_tk:
        num_k, tk = 1, f_units * 128
    else:
        num_k = _cdiv(f_units * 128, max_tk)
        tk = _cdiv(f_units, num_k) * 128
    F_pad = tk * num_k

    # Transpose + pad ONCE: (targets, F) -> (F_pad, targets).  Targets axis stays
    # unpadded so the streamed weight is only F_pad * T elements.
    w_p = jnp.zeros((F_pad, T), w_dtype).at[:F, :].set(weight.T.astype(w_dtype))
    b_p = bias.astype(jnp.float32).reshape(1, T)

    return dict(
        w=w_p, b=b_p, F=F, T=T, F_pad=F_pad, tk=tk, num_k=num_k,
        sub=sub, tb_max=tb_max, T_vmem=T_vmem, vmem_cap=vmem_cap,
        x_bytes=x_bytes, w_bytes=w_bytes,
    )


def classifier_apply(head, features):
    """out = Flatten(features) @ W^T + b  using the prepared head."""
    B = features.shape[0]
    F, T = head["F"], head["T"]
    F_pad, tk, num_k = head["F_pad"], head["tk"], head["num_k"]
    sub, tb_max, T_vmem = head["sub"], head["tb_max"], head["T_vmem"]
    x_bytes, w_bytes = head["x_bytes"], head["w_bytes"]

    x = features.reshape(B, -1)
    assert x.shape[1] == F, "features do not match num_features_for_classification"

    # Batch tiling: full-dim block for tiny batches (no padding / wasted x traffic),
    # sublane-rounded otherwise, >=2 tiles when 2 TensorCores are available (v7x).
    if B <= sub:
        tb, B_pad = B, B
    else:
        tb = min(_round_up(B, sub), tb_max)
        if _tpu_num_tensorcores() >= 2 and _round_up(B, sub) <= tb:
            tb = _round_up(_cdiv(B, 2), sub)
        B_pad = _round_up(B, tb)

    # Only pad x when needed (skips an HBM round-trip when already aligned).
    if x.shape == (B_pad, F_pad):
        x_p = x
    else:
        x_p = jnp.zeros((B_pad, F_pad), x.dtype).at[:B, :F].set(x)

    out_bytes = jnp.dtype(features.dtype).itemsize
    per_step_vmem = (
        2 * (tb * tk * x_bytes + tk * T_vmem * w_bytes)  # double-buffered inputs
        + 2 * tb * T_vmem * out_bytes                    # double-buffered output
        + tb * T_vmem * 4                                # accumulator
        + 2 * T_vmem * 4                                 # bias
    )
    vmem_limit = int(min(head["vmem_cap"] - 2 * _MIB,
                         max(32 * _MIB, per_step_vmem + 4 * _MIB)))
    vmem_limit = int(max(vmem_limit, per_step_vmem + 1 * _MIB))

    num_b = B_pad // tb
    cost = pl.CostEstimate(
        flops=2 * B_pad * F_pad * T,
        transcendentals=0,
        bytes_accessed=int(B_pad * F_pad * x_bytes
                           + num_b * F_pad * T * w_bytes
                           + B_pad * T * out_bytes),
    )
    out_shape = jax.ShapeDtypeStruct((B_pad, T), features.dtype)

    if num_k == 1:
        out_p = pl.pallas_call(
            _linear_kernel_single,
            out_shape=out_shape,
            grid_spec=pltpu.PrefetchScalarGridSpec(
                num_scalar_prefetch=0,
                grid=(num_b,),
                in_specs=[
                    pl.BlockSpec((tb, F_pad), lambda b: (b, 0)),
                    pl.BlockSpec((F_pad, T), lambda b: (0, 0)),
                    pl.BlockSpec((1, T), lambda b: (0, 0)),
                ],
                out_specs=pl.BlockSpec((tb, T), lambda b: (b, 0)),
            ),
            compiler_params=pltpu.CompilerParams(
                dimension_semantics=("parallel",),
                vmem_limit_bytes=vmem_limit,
            ),
            cost_estimate=cost,
        )(x_p, head["w"], head["b"])
    else:
        out_p = pl.pallas_call(
            _linear_kernel_ktiled,
            out_shape=out_shape,
            grid_spec=pltpu.PrefetchScalarGridSpec(
                num_scalar_prefetch=0,
                grid=(num_b, num_k),
                in_specs=[
                    pl.BlockSpec((tb, tk), lambda b, k: (b, k)),
                    pl.BlockSpec((tk, T), lambda b, k: (k, 0)),
                    pl.BlockSpec((1, T), lambda b, k: (0, 0)),
                ],
                out_specs=pl.BlockSpec((tb, T), lambda b, k: (b, 0)),
                scratch_shapes=[pltpu.VMEM((tb, T), jnp.float32)],
            ),
            compiler_params=pltpu.CompilerParams(
                dimension_semantics=("parallel", "arbitrary"),
                vmem_limit_bytes=vmem_limit,
            ),
            cost_estimate=cost,
        )(x_p, head["w"], head["b"])

    if B_pad != B:
        out_p = out_p[:B]
    return out_p


def classifier_forward(features, weight, bias, **prep_kwargs):
    """Convenience one-shot path. For repeated calls, prepare_classifier_head once."""
    prep_kwargs.setdefault("features_dtype", features.dtype)
    head = prepare_classifier_head(weight, bias, **prep_kwargs)
    return classifier_apply(head, features)


def make_classifier_params(key, targets, samples, channels):
    """Deterministic init matching make_new_classification_layer:
    xavier_normal_ weight, zero bias."""
    num_features = samples * channels
    fan_in, fan_out = num_features, targets
    std = (2.0 / (fan_in + fan_out)) ** 0.5
    w = std * jax.random.normal(key, (targets, num_features), dtype=jnp.float32)
    b = jnp.zeros((targets,), dtype=jnp.float32)
    return w, b


if __name__ == "__main__":
    key = jax.random.PRNGKey(0)
    k1, k2, k3, k4 = jax.random.split(key, 4)

    # Case 1: small, module-consistent shapes; F fits one K tile (single-shot path).
    batch, channels, samples, targets = 2, 4, 16, 8
    features = jax.random.normal(k1, (batch, channels, samples), dtype=jnp.float32)
    weight, bias = make_classifier_params(k2, targets, samples, channels)

    head = prepare_classifier_head(weight, bias, features_dtype=features.dtype)
    out = jax.block_until_ready(classifier_apply(head, features))
    ref = jnp.dot(features.reshape(batch, -1), weight.T,
                  precision=jax.lax.Precision.HIGHEST) + bias
    assert out.shape == (batch, targets)
    assert jnp.allclose(out, ref, atol=1e-4, rtol=1e-4)

    # Case 2: force the K-tiled accumulator path (block_k=256 -> 2 K tiles) with a
    # non-multiple-of-128 target count (unpadded targets axis) and non-zero bias.
    batch2, channels2, samples2, targets2 = 4, 8, 64, 5
    features2 = jax.random.normal(k3, (batch2, channels2, samples2), dtype=jnp.float32)
    weight2, bias2 = make_classifier_params(k4, targets2, samples2, channels2)
    bias2 = bias2 + 0.25
    head2 = prepare_classifier_head(weight2, bias2,
                                    features_dtype=features2.dtype, block_k=256)
    out2 = jax.block_until_ready(classifier_apply(head2, features2))
    ref2 = jnp.dot(features2.reshape(batch2, -1), weight2.T,
                   precision=jax.lax.Precision.HIGHEST) + bias2
    assert out2.shape == (batch2, targets2)
    assert jnp.allclose(out2, ref2, atol=1e-4, rtol=1e-4)

    print("KERNEL_OK")
</pallas_src>

<mosaic_0001>
module attributes {stable_mosaic.version = 11 : i64} {
  func.func @_linear_kernel_single(%arg0: i32, %arg1: memref<2x128xf32, #tpu.memory_space<vmem>>, %arg2: memref<128x8xf32, #tpu.memory_space<vmem>>, %arg3: memref<1x8xf32, #tpu.memory_space<vmem>>, %arg4: memref<2x8xf32, #tpu.memory_space<vmem>>) attributes {dimension_semantics = [#tpu.dimension_semantics<parallel>], iteration_bounds = array<i64: 1>, scalar_prefetch = 0 : i64, scratch_operands = 0 : i64, tpu.core_type = #tpu.core_type<tc>, window_params = [{transform_indices = @transform_0, window_bounds = array<i64: 2, 128>}, {pipeline_mode = #tpu.pipeline_mode<synchronous>, transform_indices = @transform_1, window_bounds = array<i64: 128, 8>}, {pipeline_mode = #tpu.pipeline_mode<synchronous>, transform_indices = @transform_2, window_bounds = array<i64: 1, 8>}, {transform_indices = @transform_3, window_bounds = array<i64: 2, 8>}]} {
    %c0 = arith.constant 0 : index
    %c0_0 = arith.constant 0 : index
    %0 = vector.load %arg1[%c0, %c0_0] : memref<2x128xf32, #tpu.memory_space<vmem>>, vector<2x128xf32>
    %c0_1 = arith.constant 0 : index
    %c0_2 = arith.constant 0 : index
    %1 = vector.load %arg2[%c0_1, %c0_2] : memref<128x8xf32, #tpu.memory_space<vmem>>, vector<128x8xf32>
    %cst = arith.constant dense<0.000000e+00> : vector<2x8xf32>
    %2 = tpu.matmul %0, %1, %cst {dimension_numbers = #tpu.dot_dimension_numbers<[1], [0], [0], [1], [0, 0, 1, 1], [], []>} : vector<2x128xf32>, vector<128x8xf32>, vector<2x8xf32> -> vector<2x8xf32>
    %c0_3 = arith.constant 0 : index
    %c0_4 = arith.constant 0 : index
    %3 = vector.load %arg3[%c0_3, %c0_4] : memref<1x8xf32, #tpu.memory_space<vmem>>, vector<1x8xf32>
    %4 = vector.broadcast %3 : vector<1x8xf32> to vector<2x8xf32>
    %5 = arith.addf %2, %4 : vector<2x8xf32>
    %c0_5 = arith.constant 0 : index
    %c0_6 = arith.constant 0 : index
    %6 = vector.load %arg4[%c0_5, %c0_6] : memref<2x8xf32, #tpu.memory_space<vmem>>, vector<2x8xf32>
    tpu.vector_store %arg4[%c0_5, %c0_6], %5 {strides = array<i32>} : memref<2x8xf32, #tpu.memory_space<vmem>>, vector<2x8xf32>,
    return
  }
  func.func @transform_0(%arg0: i32) -> (i32, i32) {
    %c0_i32 = arith.constant 0 : i32
    %c0_i32_0 = arith.constant 0 : i32
    return %arg0, %c0_i32 : i32, i32
  }
  func.func @transform_1(%arg0: i32) -> (i32, i32) {
    %c0_i32 = arith.constant 0 : i32
    %c0_i32_0 = arith.constant 0 : i32
    %c0_i32_1 = arith.constant 0 : i32
    return %c0_i32, %c0_i32_0 : i32, i32
  }
  func.func @transform_2(%arg0: i32) -> (i32, i32) {
    %c0_i32 = arith.constant 0 : i32
    %c0_i32_0 = arith.constant 0 : i32
    %c0_i32_1 = arith.constant 0 : i32
    return %c0_i32, %c0_i32_0 : i32, i32
  }
  func.func @transform_3(%arg0: i32) -> (i32, i32) {
    %c0_i32 = arith.constant 0 : i32
    %c0_i32_0 = arith.constant 0 : i32
    return %arg0, %c0_i32 : i32, i32
  }
}

</mosaic_0001>

<llo_original>
// kernel: tpu_custom_call.1
$region0: #{tpu_custom_call.1}
  #allocation0 [shape = 'u32[]', space=smem, size = 0x4, offset = 0x4, fixed_abs, tag = 'smem constant byte address 0x4 - core index']
  #allocation1 [shape = 'u32[144,128]{1,0:T(1,128)}', space=vmem, size = 0x12000, scoped, tag = 'internal scratch']
  %s0 = inlined_call_operand.vmem [shape: f32[2,128], index: 0, kind: input, shape index: {}]
  %s1 = inlined_call_operand.vmem [shape: f32[128,8], index: 1, kind: input, shape index: {}]
  %s2 = inlined_call_operand.vmem [shape: f32[1,8], index: 2, kind: input, shape index: {}]
  %s3 = inlined_call_operand.hbm [shape: f32[2,8], index: 3, kind: output, shape index: {}]
  %s4 = sld [smem:[#allocation0]]
  $region22: #{tpu_custom_call.1} parent=0
    _
  %s6 = ssub.s32 1, %s4
  %s7 = scalar_select 0, %s6, %s4
  $region1: #{tpu_custom_call.1} parent=0
    #allocation2 [shape = 'u8[1024]{0}', space=vmem, size = 0x400, scoped, tag = 'output window, operand 0, single buffered']
    #allocation3 [shape = 's32[1]{0}', space=sflag, size = 0x4, scoped, tag = 'scoped memory for tpu_custom_call.1']
    %8 = vsyncpa [#allocation3], 0
    // Predicated region
    $region2: #{tpu_custom_call.1} parent=1 // pred_check
      _
    $region3: #{tpu_custom_call.1} parent=1 // pred_check_branch
      %10 = sbr.rel (0) target = $region5
    $region4: #{tpu_custom_call.1} parent=1 // pred_region
      _
    $region5: #{tpu_custom_call.1} parent=1 // pred_fallthru
      _
    // Predicated region
    $region6: #{tpu_custom_call.1} parent=1 // pred_check
      _
    $region7: #{tpu_custom_call.1} parent=1 // pred_check_branch
      %12 = sbr.rel (0) target = $region9
    $region8: #{tpu_custom_call.1} parent=1 // pred_region
      _
    $region9: #{tpu_custom_call.1} parent=1 // pred_fallthru
      _
    // Predicated region
    $region10: #{tpu_custom_call.1} parent=1 // pred_check
      _
    $region11: #{tpu_custom_call.1} parent=1 // pred_check_branch
      %14 = sbr.rel (0) target = $region13
    $region12: #{tpu_custom_call.1} parent=1 // pred_region
      _
    $region13: #{tpu_custom_call.1} parent=1 // pred_fallthru
      _
    %v15 = vld [vmem:[%s0] sm:$0x3]
    %v16 = vld [vmem:[%s1] sm:$0xff]
    %v17 = vld [vmem:[%s1 + $0x8] sm:$0xff]
    %v18 = vld [vmem:[%s1 + $0x10] sm:$0xff]
    %v19 = vld [vmem:[%s1 + $0x18] sm:$0xff]
    %v20 = vld [vmem:[%s1 + $0x20] sm:$0xff]
    %v21 = vld [vmem:[%s1 + $0x28] sm:$0xff]
    %v22 = vld [vmem:[%s1 + $0x30] sm:$0xff]
    %v23 = vld [vmem:[%s1 + $0x38] sm:$0xff]
    %v24 = vld [vmem:[%s1 + $0x40] sm:$0xff]
    %v25 = vld [vmem:[%s1 + $0x48] sm:$0xff]
    %v26 = vld [vmem:[%s1 + $0x50] sm:$0xff]
    %v27 = vld [vmem:[%s1 + $0x58] sm:$0xff]
    %v28 = vld [vmem:[%s1 + $0x60] sm:$0xff]
    %v29 = vld [vmem:[%s1 + $0x68] sm:$0xff]
    %v30 = vld [vmem:[%s1 + $0x70] sm:$0xff]
    %v31 = vld [vmem:[%s1 + $0x78] sm:$0xff]
    %v32 = vld [vmem:[%s2] sm:$0x1]
    %v34 = vlaneseq
    %v35 = vshrl.u32 %v34, 7
    %v36 = vsub.s32 0, %v35
    %v37 = vrot.slane %v32, %v36
    %39 = vmatprep.subr.mxu0 0.0
    %40 = vmatpush1.msra.mxu0 %v16
    %41 = vmatprep.subr.mxu0 0.0
    %42 = vmatpush1.msra.mxu0 %v17
    %43 = vmatprep.subr.mxu0 0.0
    %44 = vmatpush1.msra.mxu0 %v18
    %45 = vmatprep.subr.mxu0 0.0
    %46 = vmatpush1.msra.mxu0 %v19
    %47 = vmatprep.subr.mxu0 0.0
    %48 = vmatpush1.msra.mxu0 %v20
    %49 = vmatprep.subr.mxu0 0.0
    %50 = vmatpush1.msra.mxu0 %v21
    %51 = vmatprep.subr.mxu0 0.0
    %52 = vmatpush1.msra.mxu0 %v22
    %53 = vmatprep.subr.mxu0 0.0
    %54 = vmatpush1.msra.mxu0 %v23
    %55 = vmatprep.subr.mxu0 0.0
    %56 = vmatpush1.msra.mxu0 %v24
    %57 = vmatprep.subr.mxu0 0.0
    %58 = vmatpush1.msra.mxu0 %v25
    %59 = vmatprep.subr.mxu0 0.0
    %60 = vmatpush1.msra.mxu0 %v26
    %61 = vmatprep.subr.mxu0 0.0
    %62 = vmatpush1.msra.mxu0 %v27
    %63 = vmatprep.subr.mxu0 0.0
    %64 = vmatpush1.msra.mxu0 %v28
    %65 = vmatprep.subr.mxu0 0.0
    %66 = vmatpush1.msra.mxu0 %v29
    %67 = vmatprep.subr.mxu0 0.0
    %68 = vmatpush1.msra.mxu0 %v30
    %69 = vmatprep.subr.mxu0 0.0
    %70 = vmatpush1.msra.mxu0 %v31
    %71 = vmatprep.subr.mxu0 0.0
    %72 = vmatpush1.msra.mxu0 0.0
    %73 = vmatprep.subr.mxu0 0.0
    %74 = vmatpush1.msra.mxu0 0.0
    %75 = vmatprep.subr.mxu0 0.0
    %76 = vmatpush1.msra.mxu0 0.0
    %77 = vmatprep.subr.mxu0 0.0
    %78 = vmatpush1.msra.mxu0 0.0
    %79 = vmatprep.subr.mxu0 0.0
    %80 = vmatpush1.msra.mxu0 0.0
    %81 = vmatprep.subr.mxu0 0.0
    %82 = vmatpush1.msra.mxu0 0.0
    %83 = vmatprep.subr.mxu0 0.0
    %84 = vmatpush1.msra.mxu0 0.0
    %85 = vmatprep.subr.mxu0 0.0
    %86 = vmatpush1.msra.mxu0 0.0
    %87 = vmatprep.subr.mxu0 0.0
    %88 = vmatpush1.msra.mxu0 0.0
    %89 = vmatprep.subr.mxu0 0.0
    %90 = vmatpush1.msra.mxu0 0.0
    %91 = vmatprep.subr.mxu0 0.0
    %92 = vmatpush1.msra.mxu0 0.0
    %93 = vmatprep.subr.mxu0 0.0
    %94 = vmatpush1.msra.mxu0 0.0
    %95 = vmatprep.subr.mxu0 0.0
    %96 = vmatpush1.msra.mxu0 0.0
    %97 = vmatprep.subr.mxu0 0.0
    %98 = vmatpush1.msra.mxu0 0.0
    %99 = vmatprep.subr.mxu0 0.0
    %100 = vmatpush1.msra.mxu0 0.0
    %101 = vmatprep.subr.mxu0 0.0
    %102 = vmatpush1.msra.mxu0 0.0
    %103 = vmatprep.mubr.f32.mxu0 0.0
    %104 = vmatmul.mubr.f32.gmra.mrb[0].mxu0 %v15
    %v105 = vpop.f32.mrb[0].mxu0
    %v106 = vadd.f32 %v37, %v105
    %v107 = vpop.f32.mrb[0].mxu0
    %108 = vdwg.mxu0
    %vm109 = vcmask 58368
    %110 = vst.msk [vmem:[#allocation2] sm:$0x3] %vm109, %v106
    // Predicated region
    $region14: #{tpu_custom_call.1} parent=1 // pred_check
      _
    $region15: #{tpu_custom_call.1} parent=1 // pred_check_branch
      %112 = sbr.rel (0) target = $region17
    $region16: #{tpu_custom_call.1} parent=1 // pred_region
      %s114 = ssub.s32 32, 32
      %115 = vsyncadd [#allocation3], %s114
      %s117 = sshll.u32 [#allocation2], 4
      %s118 = int_to_ptr.vmem [resolvable:$true] %s117
      %120 = dma.vmem_to_hbm [thread:$0]  %s118, 32, %s3, [#allocation3]
    $region17: #{tpu_custom_call.1} parent=1 // pred_fallthru
      _
    // Predicated region
    $region18: #{tpu_custom_call.1} parent=1 // pred_check
      _
    $region19: #{tpu_custom_call.1} parent=1 // pred_check_branch
      %122 = sbr.rel (0) target = $region21
    $region20: #{tpu_custom_call.1} parent=1 // pred_region
      %123 = dma.done [#allocation3], 32
    $region21: #{tpu_custom_call.1} parent=1 // pred_fallthru
      _
    %124 = vsyncpa [#allocation3], 1

</llo_original>
